<compile_context>
chip_gen: v5e
topology: v5e:2x2
jax: 0.10.0
libtpu: 0.0.40
codegen_flags: <defaults>
</compile_context>

<pallas_src>
import jax
import jax.numpy as jnp
from jax.experimental import pallas as pl
from jax.experimental.pallas import tpu as pltpu


def _round_up(x, m):
    return ((x + m - 1) // m) * m


def _make_actor_kernel(max_action, dot_dtype):
    """Build the fused-MLP kernel; max_action / dot_dtype are static Python values."""

    def kernel(x_ref, w1_ref, b1_ref, w2_ref, b2_ref, w3_ref, b3_ref, o_ref):
        x = x_ref[...]                                     # already dot_dtype

        # Layer 1: MXU matmul (f32 accumulation) + f32 bias + ReLU (VPU).
        h1 = jnp.dot(x, w1_ref[...], preferred_element_type=jnp.float32) + b1_ref[...]
        h1 = jnp.maximum(h1, 0.0)

        # Layer 2.
        h2 = jnp.dot(h1.astype(dot_dtype), w2_ref[...],
                     preferred_element_type=jnp.float32) + b2_ref[...]
        h2 = jnp.maximum(h2, 0.0)

        # Layer 3 + Tanh (EUP, f32).
        u = jnp.dot(h2.astype(dot_dtype), w3_ref[...],
                    preferred_element_type=jnp.float32) + b3_ref[...]
        u = jnp.tanh(u)

        if max_action is not None:                         # static, resolved at trace time
            u = u * jnp.float32(max_action)

        o_ref[...] = u.astype(o_ref.dtype)

    return kernel


def actor_forward(state, params, max_action=None, *, block_b=2048,
                  dot_dtype=jnp.bfloat16):
    """Actor forward:  [B, n_states] -> [B, n_actions] (float32).

    params: w1 [n_states,H], b1 [1,H], w2 [H,H], b2 [1,H], w3 [H,n_actions], b3 [1,n_actions]
    """
    assert state.ndim == 2
    B, n_states = state.shape
    h1_dim = params["w1"].shape[1]
    h2_dim = params["w2"].shape[1]
    n_actions = params["w3"].shape[1]

    # ---- batch tile selection -------------------------------------------------
    # Multiple of 16 (bf16 sublane packing; also satisfies the (8,128) rule), capped
    # by block_b.  For small/medium B aim for >=2 grid steps so the parallel axis can
    # use both v7x TensorCores; if even half the batch rounds past B, fall back to a
    # single full-array block (always legal: block dim == array dim).
    if B > block_b:
        TB = _round_up(block_b, 16)
    else:
        half = _round_up(pl.cdiv(B, 2), 16)
        TB = half if half < B else B
    grid = (pl.cdiv(B, TB),)

    # ---- operand prep ---------------------------------------------------------
    # bf16 matmul operands (halves HBM/VMEM footprint of x and W on v6e/v7x; MXU is
    # native bf16 with f32 accumulation).  Biases stay f32.
    x = state.astype(dot_dtype)
    w1 = params["w1"].astype(dot_dtype)
    w2 = params["w2"].astype(dot_dtype)
    w3 = params["w3"].astype(dot_dtype)
    b1 = params["b1"].astype(jnp.float32)
    b2 = params["b2"].astype(jnp.float32)
    b3 = params["b3"].astype(jnp.float32)

    def resident(arr):
        # Weights/biases: same block every grid step -> stay VMEM-resident.
        return pl.BlockSpec(arr.shape, lambda i: (0, 0))

    in_specs = [
        pl.BlockSpec((TB, n_states), lambda i: (i, 0)),    # activations tiled over batch
        resident(w1), resident(b1),
        resident(w2), resident(b2),
        resident(w3), resident(b3),
    ]
    out_spec = pl.BlockSpec((TB, n_actions), lambda i: (i, 0))

    dsz = jnp.dtype(dot_dtype).itemsize
    flops = 2 * B * (n_states * h1_dim + h1_dim * h2_dim + h2_dim * n_actions)
    bytes_accessed = (
        B * n_states * dsz
        + (w1.size + w2.size + w3.size) * dsz
        + (b1.size + b2.size + b3.size) * 4
        + B * n_actions * 4)
    cost = pl.CostEstimate(flops=flops,
                           transcendentals=B * n_actions,      # tanh
                           bytes_accessed=bytes_accessed)

    return pl.pallas_call(
        _make_actor_kernel(max_action, dot_dtype),
        out_shape=jax.ShapeDtypeStruct((B, n_actions), jnp.float32),
        grid=grid,
        in_specs=in_specs,
        out_specs=out_spec,
        compiler_params=pltpu.CompilerParams(
            dimension_semantics=("parallel",)),   # batch axis -> dual-TC on v7x
        cost_estimate=cost,
    )(x, w1, b1, w2, b2, w3, b3)


def init_params(key, n_states, hidden_units, n_actions):
    """Deterministic synthetic parameters (stored as [in, out])."""
    k1, k2, k3 = jax.random.split(key, 3)

    def dense(k, fan_in, fan_out):
        # stands in for the module's reset_parameters / initialize_weight
        w = jax.random.normal(k, (fan_in, fan_out), dtype=jnp.float32)
        w = w * (1.0 / jnp.sqrt(jnp.float32(fan_in)))
        b = jnp.zeros((1, fan_out), dtype=jnp.float32)
        return w, b

    w1, b1 = dense(k1, n_states, hidden_units)
    w2, b2 = dense(k2, hidden_units, hidden_units)
    w3, b3 = dense(k3, hidden_units, n_actions)
    return {"w1": w1, "b1": b1, "w2": w2, "b2": b2, "w3": w3, "b3": b3}


def reference_forward(state, p, max_action=None, dot_dtype=jnp.float32):
    """Pure-JAX reference with the same matmul-operand dtype as the kernel."""
    def dot(a, w):
        return jnp.dot(a.astype(dot_dtype), w.astype(dot_dtype),
                       preferred_element_type=jnp.float32)
    h1 = jnp.maximum(dot(state, p["w1"]) + p["b1"], 0.0)
    h2 = jnp.maximum(dot(h1, p["w2"]) + p["b2"], 0.0)
    u = jnp.tanh(dot(h2, p["w3"]) + p["b3"])
    return u if max_action is None else max_action * u


if __name__ == "__main__":
    # Small shapes consistent with the module: batch=4, n_states=8,
    # args.hidden_units=32, n_actions=4, max_action=2.0
    batch, n_states, hidden_units, n_actions = 4, 8, 32, 4
    max_action = 2.0

    key = jax.random.PRNGKey(0)
    k_x, k_p = jax.random.split(key)
    state = jax.random.normal(k_x, (batch, n_states), dtype=jnp.float32)
    params = init_params(k_p, n_states, hidden_units, n_actions)

    # 1) Default path: bf16 matmul operands, max_action scaling.
    out = jax.block_until_ready(actor_forward(state, params, max_action=max_action))
    ref = reference_forward(state, params, max_action=max_action,
                            dot_dtype=jnp.bfloat16)
    assert out.shape == (batch, n_actions)
    assert jnp.allclose(out, ref, atol=1e-4, rtol=1e-4)

    # 2) f32 path, max_action=None (module returns raw tanh output).
    out_u = jax.block_until_ready(
        actor_forward(state, params, max_action=None, dot_dtype=jnp.float32))
    ref_u = reference_forward(state, params, max_action=None, dot_dtype=jnp.float32)
    assert jnp.allclose(out_u, ref_u, atol=1e-5, rtol=1e-5)

    # 3) Non-divisible multi-step batch: exercises >=2 grid steps and the masked
    #    partial last block (no wrapper-side padding).
    big_b = 100
    state_big = jax.random.normal(k_x, (big_b, n_states), dtype=jnp.float32)
    out_big = jax.block_until_ready(
        actor_forward(state_big, params, max_action=max_action))
    ref_big = reference_forward(state_big, params, max_action=max_action,
                                dot_dtype=jnp.bfloat16)
    assert out_big.shape == (big_b, n_actions)
    assert jnp.allclose(out_big, ref_big, atol=1e-4, rtol=1e-4)

    print("KERNEL_OK")
</pallas_src>

<mosaic_0001>
module attributes {stable_mosaic.version = 11 : i64} {
  func.func @kernel(%arg0: i32, %arg1: memref<4x8xbf16, #tpu.memory_space<vmem>>, %arg2: memref<8x32xbf16, #tpu.memory_space<vmem>>, %arg3: memref<1x32xf32, #tpu.memory_space<vmem>>, %arg4: memref<32x32xbf16, #tpu.memory_space<vmem>>, %arg5: memref<1x32xf32, #tpu.memory_space<vmem>>, %arg6: memref<32x4xbf16, #tpu.memory_space<vmem>>, %arg7: memref<1x4xf32, #tpu.memory_space<vmem>>, %arg8: memref<4x4xf32, #tpu.memory_space<vmem>>) attributes {dimension_semantics = [#tpu.dimension_semantics<parallel>], iteration_bounds = array<i64: 1>, scalar_prefetch = 0 : i64, scratch_operands = 0 : i64, tpu.core_type = #tpu.core_type<tc>, window_params = [{transform_indices = @transform_0, window_bounds = array<i64: 4, 8>}, {pipeline_mode = #tpu.pipeline_mode<synchronous>, transform_indices = @transform_1, window_bounds = array<i64: 8, 32>}, {pipeline_mode = #tpu.pipeline_mode<synchronous>, transform_indices = @transform_2, window_bounds = array<i64: 1, 32>}, {pipeline_mode = #tpu.pipeline_mode<synchronous>, transform_indices = @transform_3, window_bounds = array<i64: 32, 32>}, {pipeline_mode = #tpu.pipeline_mode<synchronous>, transform_indices = @transform_4, window_bounds = array<i64: 1, 32>}, {pipeline_mode = #tpu.pipeline_mode<synchronous>, transform_indices = @transform_5, window_bounds = array<i64: 32, 4>}, {pipeline_mode = #tpu.pipeline_mode<synchronous>, transform_indices = @transform_6, window_bounds = array<i64: 1, 4>}, {transform_indices = @transform_7, window_bounds = array<i64: 4, 4>}]} {
    %c0 = arith.constant 0 : index
    %c0_0 = arith.constant 0 : index
    %0 = vector.load %arg1[%c0, %c0_0] : memref<4x8xbf16, #tpu.memory_space<vmem>>, vector<4x8xbf16>
    %c0_1 = arith.constant 0 : index
    %c0_2 = arith.constant 0 : index
    %1 = vector.load %arg2[%c0_1, %c0_2] : memref<8x32xbf16, #tpu.memory_space<vmem>>, vector<8x32xbf16>
    %cst = arith.constant dense<0.000000e+00> : vector<4x32xf32>
    %2 = tpu.matmul %0, %1, %cst {dimension_numbers = #tpu.dot_dimension_numbers<[1], [0], [0], [1], [0, 0, 1, 1], [], []>} : vector<4x8xbf16>, vector<8x32xbf16>, vector<4x32xf32> -> vector<4x32xf32>
    %c0_3 = arith.constant 0 : index
    %c0_4 = arith.constant 0 : index
    %3 = vector.load %arg3[%c0_3, %c0_4] : memref<1x32xf32, #tpu.memory_space<vmem>>, vector<1x32xf32>
    %4 = vector.broadcast %3 : vector<1x32xf32> to vector<4x32xf32>
    %5 = arith.addf %2, %4 : vector<4x32xf32>
    %cst_5 = arith.constant 0.000000e+00 : f32
    %6 = vector.broadcast %cst_5 : f32 to vector<4x32xf32>
    %7 = arith.maximumf %5, %6 : vector<4x32xf32>
    %8 = arith.truncf %7 : vector<4x32xf32> to vector<4x32xbf16>
    %c0_6 = arith.constant 0 : index
    %c0_7 = arith.constant 0 : index
    %9 = vector.load %arg4[%c0_6, %c0_7] : memref<32x32xbf16, #tpu.memory_space<vmem>>, vector<32x32xbf16>
    %cst_8 = arith.constant dense<0.000000e+00> : vector<4x32xf32>
    %10 = tpu.matmul %8, %9, %cst_8 {dimension_numbers = #tpu.dot_dimension_numbers<[1], [0], [0], [1], [0, 0, 1, 1], [], []>} : vector<4x32xbf16>, vector<32x32xbf16>, vector<4x32xf32> -> vector<4x32xf32>
    %c0_9 = arith.constant 0 : index
    %c0_10 = arith.constant 0 : index
    %11 = vector.load %arg5[%c0_9, %c0_10] : memref<1x32xf32, #tpu.memory_space<vmem>>, vector<1x32xf32>
    %12 = vector.broadcast %11 : vector<1x32xf32> to vector<4x32xf32>
    %13 = arith.addf %10, %12 : vector<4x32xf32>
    %cst_11 = arith.constant 0.000000e+00 : f32
    %14 = vector.broadcast %cst_11 : f32 to vector<4x32xf32>
    %15 = arith.maximumf %13, %14 : vector<4x32xf32>
    %16 = arith.truncf %15 : vector<4x32xf32> to vector<4x32xbf16>
    %c0_12 = arith.constant 0 : index
    %c0_13 = arith.constant 0 : index
    %17 = vector.load %arg6[%c0_12, %c0_13] : memref<32x4xbf16, #tpu.memory_space<vmem>>, vector<32x4xbf16>
    %cst_14 = arith.constant dense<0.000000e+00> : vector<4x4xf32>
    %18 = tpu.matmul %16, %17, %cst_14 {dimension_numbers = #tpu.dot_dimension_numbers<[1], [0], [0], [1], [0, 0, 1, 1], [], []>} : vector<4x32xbf16>, vector<32x4xbf16>, vector<4x4xf32> -> vector<4x4xf32>
    %c0_15 = arith.constant 0 : index
    %c0_16 = arith.constant 0 : index
    %19 = vector.load %arg7[%c0_15, %c0_16] : memref<1x4xf32, #tpu.memory_space<vmem>>, vector<1x4xf32>
    %20 = vector.broadcast %19 : vector<1x4xf32> to vector<4x4xf32>
    %21 = arith.addf %18, %20 : vector<4x4xf32>
    %22 = math.tanh %21 : vector<4x4xf32>
    %cst_17 = arith.constant 2.000000e+00 : f32
    %23 = vector.broadcast %cst_17 : f32 to vector<4x4xf32>
    %24 = arith.mulf %22, %23 : vector<4x4xf32>
    %c0_18 = arith.constant 0 : index
    %c0_19 = arith.constant 0 : index
    %25 = vector.load %arg8[%c0_18, %c0_19] : memref<4x4xf32, #tpu.memory_space<vmem>>, vector<4x4xf32>
    tpu.vector_store %arg8[%c0_18, %c0_19], %24 {strides = array<i32>} : memref<4x4xf32, #tpu.memory_space<vmem>>, vector<4x4xf32>,
    return
  }
  func.func @transform_0(%arg0: i32) -> (i32, i32) {
    %c0_i32 = arith.constant 0 : i32
    %c0_i32_0 = arith.constant 0 : i32
    return %arg0, %c0_i32 : i32, i32
  }
  func.func @transform_1(%arg0: i32) -> (i32, i32) {
    %c0_i32 = arith.constant 0 : i32
    %c0_i32_0 = arith.constant 0 : i32
    %c0_i32_1 = arith.constant 0 : i32
    return %c0_i32, %c0_i32_0 : i32, i32
  }
  func.func @transform_2(%arg0: i32) -> (i32, i32) {
    %c0_i32 = arith.constant 0 : i32
    %c0_i32_0 = arith.constant 0 : i32
    %c0_i32_1 = arith.constant 0 : i32
    return %c0_i32, %c0_i32_0 : i32, i32
  }
  func.func @transform_3(%arg0: i32) -> (i32, i32) {
    %c0_i32 = arith.constant 0 : i32
    %c0_i32_0 = arith.constant 0 : i32
    %c0_i32_1 = arith.constant 0 : i32
    return %c0_i32, %c0_i32_0 : i32, i32
  }
  func.func @transform_4(%arg0: i32) -> (i32, i32) {
    %c0_i32 = arith.constant 0 : i32
    %c0_i32_0 = arith.constant 0 : i32
    %c0_i32_1 = arith.constant 0 : i32
    return %c0_i32, %c0_i32_0 : i32, i32
  }
  func.func @transform_5(%arg0: i32) -> (i32, i32) {
    %c0_i32 = arith.constant 0 : i32
    %c0_i32_0 = arith.constant 0 : i32
    %c0_i32_1 = arith.constant 0 : i32
    return %c0_i32, %c0_i32_0 : i32, i32
  }
  func.func @transform_6(%arg0: i32) -> (i32, i32) {
    %c0_i32 = arith.constant 0 : i32
    %c0_i32_0 = arith.constant 0 : i32
    %c0_i32_1 = arith.constant 0 : i32
    return %c0_i32, %c0_i32_0 : i32, i32
  }
  func.func @transform_7(%arg0: i32) -> (i32, i32) {
    %c0_i32 = arith.constant 0 : i32
    %c0_i32_0 = arith.constant 0 : i32
    return %arg0, %c0_i32 : i32, i32
  }
}

</mosaic_0001>

<llo_original>
// kernel: tpu_custom_call.1
$region0: #{tpu_custom_call.1}
  #allocation0 [shape = 'u32[]', space=smem, size = 0x4, offset = 0x4, fixed_abs, tag = 'smem constant byte address 0x4 - core index']
  #allocation1 [shape = 'u32[72,128]{1,0:T(1,128)}', space=vmem, size = 0x9000, scoped, tag = 'internal scratch']
  %s0 = inlined_call_operand.hbm [shape: bf16[4,8], index: 0, kind: input, shape index: {}]
  %s1 = inlined_call_operand.vmem [shape: bf16[8,32], index: 1, kind: input, shape index: {}]
  %s2 = inlined_call_operand.hbm [shape: f32[1,32], index: 2, kind: input, shape index: {}]
  %s3 = inlined_call_operand.vmem [shape: bf16[32,32], index: 3, kind: input, shape index: {}]
  %s4 = inlined_call_operand.hbm [shape: f32[1,32], index: 4, kind: input, shape index: {}]
  %s5 = inlined_call_operand.vmem [shape: bf16[32,4], index: 5, kind: input, shape index: {}]
  %s6 = inlined_call_operand.vmem [shape: f32[1,4], index: 6, kind: input, shape index: {}]
  %s7 = inlined_call_operand.hbm [shape: f32[4,4], index: 7, kind: output, shape index: {}]
  %s8 = sld [smem:[#allocation0]]
  $region50: #{tpu_custom_call.1} parent=0
    _
  %s10 = ssub.s32 1, %s8
  %s11 = scalar_select 0, %s10, %s8
  $region1: #{tpu_custom_call.1} parent=0
    #allocation2 [shape = 'u8[1024]{0}', space=vmem, size = 0x400, scoped, tag = 'input window, operand 0, single buffered']
    #allocation3 [shape = 's32[1]{0}', space=sflag, size = 0x4, scoped, tag = 'scoped memory for tpu_custom_call.1']
    #allocation4 [shape = 's32[1]{0}', space=sflag, size = 0x4, scoped, tag = 'scoped memory for tpu_custom_call.1']
    #allocation5 [shape = 'u8[512]{0}', space=vmem, size = 0x400, scoped, tag = 'input window, operand 2, single buffered']
    #allocation6 [shape = 's32[1]{0}', space=sflag, size = 0x4, scoped, tag = 'scoped memory for tpu_custom_call.1']
    #allocation7 [shape = 'u8[512]{0}', space=vmem, size = 0x400, scoped, tag = 'input window, operand 4, single buffered']
    #allocation8 [shape = 'u8[2048]{0}', space=vmem, size = 0x800, scoped, tag = 'output window, operand 0, single buffered']
    %12 = vsyncpa [#allocation3], 0
    %13 = vsyncpa [#allocation6], 0
    %14 = vsyncpa [#allocation4], 0
    // Predicated region
    $region2: #{tpu_custom_call.1} parent=1 // pred_check
      _
    $region3: #{tpu_custom_call.1} parent=1 // pred_check_branch
      %16 = sbr.rel (0) target = $region5
    $region4: #{tpu_custom_call.1} parent=1 // pred_region
      %18 = vsyncadd [#allocation3], 0
      %s20 = sshll.u32 %s0, 4
      %s21 = int_to_ptr.hbm [resolvable:$true] %s20
      %s22 = sshll.u32 [#allocation2], 4
      %s23 = int_to_ptr.vmem [resolvable:$true] %s22
      %25 = dma.hbm_to_vmem [thread:$0]  %s21, 32, %s23, [#allocation3]
    $region5: #{tpu_custom_call.1} parent=1 // pred_fallthru
      _
    // Predicated region
    $region6: #{tpu_custom_call.1} parent=1 // pred_check
      _
    $region7: #{tpu_custom_call.1} parent=1 // pred_check_branch
      %27 = sbr.rel (0) target = $region9
    $region8: #{tpu_custom_call.1} parent=1 // pred_region
      _
    $region9: #{tpu_custom_call.1} parent=1 // pred_fallthru
      _
    // Predicated region
    $region10: #{tpu_custom_call.1} parent=1 // pred_check
      _
    $region11: #{tpu_custom_call.1} parent=1 // pred_check_branch
      %29 = sbr.rel (0) target = $region13
    $region12: #{tpu_custom_call.1} parent=1 // pred_region
      %31 = vsyncadd [#allocation6], 0
      %s33 = sshll.u32 %s2, 4
      %s34 = int_to_ptr.hbm [resolvable:$true] %s33
      %s35 = sshll.u32 [#allocation5], 4
      %s36 = int_to_ptr.vmem [resolvable:$true] %s35
      %38 = dma.hbm_to_vmem [thread:$0]  %s34, 16, %s36, [#allocation6]
    $region13: #{tpu_custom_call.1} parent=1 // pred_fallthru
      _
    // Predicated region
    $region14: #{tpu_custom_call.1} parent=1 // pred_check
      _
    $region15: #{tpu_custom_call.1} parent=1 // pred_check_branch
      %40 = sbr.rel (0) target = $region17
    $region16: #{tpu_custom_call.1} parent=1 // pred_region
      _
    $region17: #{tpu_custom_call.1} parent=1 // pred_fallthru
      _
    // Predicated region
    $region18: #{tpu_custom_call.1} parent=1 // pred_check
      _
    $region19: #{tpu_custom_call.1} parent=1 // pred_check_branch
      %42 = sbr.rel (0) target = $region21
    $region20: #{tpu_custom_call.1} parent=1 // pred_region
      %44 = vsyncadd [#allocation6], 0
      %s46 = sshll.u32 %s4, 4
      %s47 = int_to_ptr.hbm [resolvable:$true] %s46
      %s48 = sshll.u32 [#allocation7], 4
      %s49 = int_to_ptr.vmem [resolvable:$true] %s48
      %51 = dma.hbm_to_vmem [thread:$0]  %s47, 16, %s49, [#allocation6]
    $region21: #{tpu_custom_call.1} parent=1 // pred_fallthru
      _
    // Predicated region
    $region22: #{tpu_custom_call.1} parent=1 // pred_check
      _
    $region23: #{tpu_custom_call.1} parent=1 // pred_check_branch
      %53 = sbr.rel (0) target = $region25
    $region24: #{tpu_custom_call.1} parent=1 // pred_region
      _
    $region25: #{tpu_custom_call.1} parent=1 // pred_fallthru
      _
    // Predicated region
    $region26: #{tpu_custom_call.1} parent=1 // pred_check
      _
    $region27: #{tpu_custom_call.1} parent=1 // pred_check_branch
      %55 = sbr.rel (0) target = $region29
    $region28: #{tpu_custom_call.1} parent=1 // pred_region
      _
    $region29: #{tpu_custom_call.1} parent=1 // pred_fallthru
      _
    // Predicated region
    $region30: #{tpu_custom_call.1} parent=1 // pred_check
      _
    $region31: #{tpu_custom_call.1} parent=1 // pred_check_branch
      %57 = sbr.rel (0) target = $region33
    $region32: #{tpu_custom_call.1} parent=1 // pred_region
      %59 = dma.done [#allocation3], 32
    $region33: #{tpu_custom_call.1} parent=1 // pred_fallthru
      _
    // Predicated region
    $region34: #{tpu_custom_call.1} parent=1 // pred_check
      _
    $region35: #{tpu_custom_call.1} parent=1 // pred_check_branch
      %61 = sbr.rel (0) target = $region37
    $region36: #{tpu_custom_call.1} parent=1 // pred_region
      %63 = dma.done [#allocation6], 16
    $region37: #{tpu_custom_call.1} parent=1 // pred_fallthru
      _
    // Predicated region
    $region38: #{tpu_custom_call.1} parent=1 // pred_check
      _
    $region39: #{tpu_custom_call.1} parent=1 // pred_check_branch
      %65 = sbr.rel (0) target = $region41
    $region40: #{tpu_custom_call.1} parent=1 // pred_region
      %67 = dma.done [#allocation6], 16
    $region41: #{tpu_custom_call.1} parent=1 // pred_fallthru
      _
    %v69 = vld [vmem:[#allocation2] sm:$0x3]
    %v70 = vld [vmem:[%s1] sm:$0xf]
    %v71 = vld [vmem:[#allocation5] sm:$0x1]
    %v73 = vperm.slane %v71, 0
    %vm75 = vcmask 64512
    %v77 = vsel %vm75, %v69, 0
    %vm79 = vcmask 1043456
    %v81 = vsel %vm79, %v70, 0
    %83 = vmatpush.bf16.msra.mxu0 0
    %84 = vmatpush.bf16.msra.mxu0 0
    %85 = vmatpush.bf16.msra.mxu0 0
    %86 = vmatpush.bf16.msra.mxu0 0
    %87 = vmatpush.bf16.msra.mxu0 0
    %88 = vmatpush.bf16.msra.mxu0 0
    %89 = vmatpush.bf16.msra.mxu0 0
    %90 = vmatpush.bf16.msra.mxu0 %v81
    %91 = vmatmul.bf16.gmra.mxu0 %v77
    %v92 = vpop.f32.mrf.mxu0
    %v93 = vadd.f32 %v73, %v92
    %v94 = vpop.f32.mrf.mxu0
    %95 = vdwg.mxu0
    %v96 = vmax.f32 %v93, 0.0
    %v97 = vpack.c.bf16 %v96, %v96
    %v98 = vld [vmem:[%s3] sm:$0xf]
    %v99 = vld [vmem:[%s3 + $0x4] sm:$0xf]
    %v100 = vld [vmem:[%s3 + $0x8] sm:$0xf]
    %v101 = vld [vmem:[%s3 + $0xc] sm:$0xf]
    %v102 = vld [vmem:[#allocation7] sm:$0x1]
    %v104 = vperm.slane %v102, 0
    %v110 = vunpack.c.l.b16 %v98
    %v111 = vunpack.c.l.b16 %v99
    %v112 = vunpack.c.l.b16 %v100
    %v113 = vunpack.c.l.b16 %v101
    %v114 = vpack.c.b16 %v111, %v110
    %v115 = vpack.c.b16 %v113, %v112
    %vm118 = vcmask 261120
    %v120 = vsel %vm118, %v97, 0
    %122 = vmatpush.bf16.msra.mxu0 0
    %123 = vmatpush.bf16.msra.mxu0 0
    %124 = vmatpush.bf16.msra.mxu0 0
    %125 = vmatpush.bf16.msra.mxu0 0
    %126 = vmatpush.bf16.msra.mxu0 0
    %127 = vmatpush.bf16.msra.mxu0 0
    %128 = vmatpush.bf16.msra.mxu0 %v115
    %129 = vmatpush.bf16.msra.mxu0 %v114
    %130 = vmatmul.bf16.gmra.mxu0 %v120
    %v131 = vpop.f32.mrf.mxu0
    %v132 = vadd.f32 %v104, %v131
    %v133 = vpop.f32.mrf.mxu0
    %134 = vdwg.mxu0
    %v135 = vmax.f32 %v132, 0.0
    %v136 = vpack.c.bf16 %v135, %v135
    %v137 = vld [vmem:[%s5] sm:$0xf]
    %v138 = vld [vmem:[%s5 + $0x4] sm:$0xf]
    %v139 = vld [vmem:[%s5 + $0x8] sm:$0xf]
    %v140 = vld [vmem:[%s5 + $0xc] sm:$0xf]
    %v141 = vld [vmem:[%s6] sm:$0x1]
    %v143 = vperm.slane %v141, 0
    %v149 = vunpack.c.l.b16 %v137
    %v150 = vunpack.c.l.b16 %v138
    %v151 = vunpack.c.l.b16 %v139
    %v152 = vunpack.c.l.b16 %v140
    %v153 = vpack.c.b16 %v150, %v149
    %v154 = vpack.c.b16 %v152, %v151
    %v158 = vsel %vm118, %v136, 0
    %160 = vmatpush.bf16.msra.mxu0 0
    %161 = vmatpush.bf16.msra.mxu0 0
    %162 = vmatpush.bf16.msra.mxu0 0
    %163 = vmatpush.bf16.msra.mxu0 0
    %164 = vmatpush.bf16.msra.mxu0 0
    %165 = vmatpush.bf16.msra.mxu0 0
    %166 = vmatpush.bf16.msra.mxu0 %v154
    %167 = vmatpush.bf16.msra.mxu0 %v153
    %168 = vmatmul.bf16.gmra.mxu0 %v158
    %v169 = vpop.f32.mrf.mxu0
    %v170 = vadd.f32 %v143, %v169
    %v171 = vpop.f32.mrf.mxu0
    %172 = vdwg.mxu0
    %v173 = vtanh.pop %v170
    %v174 = vmul.f32 %v173, 2.0
    %vm175 = vcmask 27648
    %176 = vst.msk [vmem:[#allocation8] sm:$0xf] %vm175, %v174
    // Predicated region
    $region42: #{tpu_custom_call.1} parent=1 // pred_check
      _
    $region43: #{tpu_custom_call.1} parent=1 // pred_check_branch
      %178 = sbr.rel (0) target = $region45
    $region44: #{tpu_custom_call.1} parent=1 // pred_region
      %180 = vsyncadd [#allocation4], 0
      %s182 = sshll.u32 [#allocation8], 4
      %s183 = int_to_ptr.vmem [resolvable:$true] %s182
      %s184 = sshll.u32 %s7, 4
      %s185 = int_to_ptr.hbm [resolvable:$true] %s184
      %187 = dma.vmem_to_hbm [thread:$0]  %s183, 64, %s185, [#allocation4]
    $region45: #{tpu_custom_call.1} parent=1 // pred_fallthru
      _
    // Predicated region
    $region46: #{tpu_custom_call.1} parent=1 // pred_check
      _
    $region47: #{tpu_custom_call.1} parent=1 // pred_check_branch
      %189 = sbr.rel (0) target = $region49
    $region48: #{tpu_custom_call.1} parent=1 // pred_region
      %191 = dma.done [#allocation4], 64
    $region49: #{tpu_custom_call.1} parent=1 // pred_fallthru
      _
    %192 = vsyncpa [#allocation3], 1
    %193 = vsyncpa [#allocation6], 1
    %194 = vsyncpa [#allocation4], 1

</llo_original>
